<compile_context>
chip_gen: v7x
topology: tpu7x:2x2x1
jax: 0.10.0
libtpu: 0.0.40
codegen_flags: <defaults>
</compile_context>

<pallas_src>
import functools

import jax
import jax.numpy as jnp
from jax import lax
from jax.experimental import pallas as pl
from jax.experimental.pallas import tpu as pltpu


def _round_up(a: int, b: int) -> int:
    return ((a + b - 1) // b) * b


def _matmul_tile(x_tile, w_tile):
    # (tm, tk) x (tn, tk) contracted over the K axis of both -> (tm, tn).
    # Transposed contraction lowers to the same MXU op; avoids wrapper W.T.
    return lax.dot_general(
        x_tile, w_tile,
        dimension_numbers=(((1,), (1,)), ((), ())),
        preferred_element_type=jnp.float32,
    )


def adapter_linear_kernel_multi_k(x_ref, w_ref, svec_ref, sbvec_ref,
                                  o_ref, acc_ref):
    """General path: K split across grid axis 2, f32 accumulator scratch.

    x_ref:     (tm, tk)   activations tile
    w_ref:     (tn, tk)   weight tile in native (out, in) layout
    svec_ref:  (1, tn)    adapter_scale, f32
    sbvec_ref: (1, tn)    adapter_scale * (bias + adapter_bias), f32
    o_ref:     (tm, tn)   output tile
    acc_ref:   (tm, tn)   f32 accumulator scratch (persists across K steps)
    """
    k = pl.program_id(2)

    @pl.when(k == 0)
    def _():
        acc_ref[...] = jnp.zeros_like(acc_ref)

    acc_ref[...] += _matmul_tile(x_ref[...], w_ref[...])

    @pl.when(k == pl.num_programs(2) - 1)
    def _():
        o_ref[...] = (acc_ref[...] * svec_ref[...]
                      + sbvec_ref[...]).astype(o_ref.dtype)


def adapter_linear_kernel_single_k(x_ref, w_ref, svec_ref, sbvec_ref, o_ref):
    """Fast path when the whole K dimension fits one tile: no scratch."""
    acc = _matmul_tile(x_ref[...], w_ref[...])
    o_ref[...] = (acc * svec_ref[...] + sbvec_ref[...]).astype(o_ref.dtype)


@functools.partial(jax.jit, static_argnames=("tm", "tn", "tk"))
def adapter_v2_linear(x, weight, bias, adapter_bias, adapter_scale,
                      *, tm: int = 256, tn: int = 256, tk: int = 512):
    """x: (..., in_features); weight: (out_features, in_features)."""
    in_features = x.shape[-1]
    out_features = weight.shape[0]
    lead_shape = x.shape[:-1]

    x2d = x.reshape(-1, in_features)
    M, K = x2d.shape
    N = out_features

    # Effective tile sizes: clamp to the (alignment-padded) problem dims so
    # small shapes get a single tile, large shapes get MXU-sized tiles.
    tm_e = min(tm, _round_up(M, 8))
    tn_e = min(tn, _round_up(N, 128))
    tk_e = min(tk, _round_up(K, 128))

    M_pad = _round_up(M, tm_e)
    N_pad = _round_up(N, tn_e)
    K_pad = _round_up(K, tk_e)

    # Zero-pad to tile multiples (zeros contribute nothing to the matmul).
    if (M_pad, K_pad) != (M, K):
        x2d = jnp.pad(x2d, ((0, M_pad - M), (0, K_pad - K)))
    w = weight  # keep native (N, K) layout — no transpose
    if (N_pad, K_pad) != (N, K):
        w = jnp.pad(w, ((0, N_pad - N), (0, K_pad - K)))

    # Fold biases and scale: y = scale * acc + scale * (bias + adapter_bias).
    b_total = adapter_bias.astype(jnp.float32)
    if bias is not None:
        b_total = b_total + bias.astype(jnp.float32)
    svec = adapter_scale.astype(jnp.float32)
    sbvec = (svec * b_total).reshape(1, N)
    svec = svec.reshape(1, N)
    if N_pad != N:
        svec = jnp.pad(svec, ((0, 0), (0, N_pad - N)))
        sbvec = jnp.pad(sbvec, ((0, 0), (0, N_pad - N)))

    grid_k = K_pad // tk_e
    grid = (M_pad // tm_e, N_pad // tn_e, grid_k)

    # VMEM budget: double-buffered streamed inputs + output + f32 accumulator.
    it_x = x2d.dtype.itemsize
    it_w = w.dtype.itemsize
    it_o = x.dtype.itemsize
    working_set = (2 * (tm_e * tk_e * it_x + tn_e * tk_e * it_w + 2 * tn_e * 4)
                   + 2 * tm_e * tn_e * it_o
                   + tm_e * tn_e * 4)
    vmem_limit = int(min(max(2 * working_set, 16 * 1024 * 1024),
                         64 * 1024 * 1024))

    cost = pl.CostEstimate(
        flops=2 * M * K * N,
        transcendentals=0,
        bytes_accessed=(M * K * it_x + N * K * it_w + M * N * it_o + 2 * N * 4),
    )

    if grid_k == 1:
        kernel = adapter_linear_kernel_single_k
        scratch_shapes = []
    else:
        kernel = adapter_linear_kernel_multi_k
        scratch_shapes = [pltpu.VMEM((tm_e, tn_e), jnp.float32)]

    out = pl.pallas_call(
        kernel,
        out_shape=jax.ShapeDtypeStruct((M_pad, N_pad), x.dtype),
        grid_spec=pltpu.PrefetchScalarGridSpec(
            num_scalar_prefetch=0,
            grid=grid,
            in_specs=[
                pl.BlockSpec((tm_e, tk_e), lambda i, j, k: (i, k)),  # x tile
                pl.BlockSpec((tn_e, tk_e), lambda i, j, k: (j, k)),  # W tile (N,K)
                pl.BlockSpec((1, tn_e), lambda i, j, k: (0, j)),     # adapter scale
                pl.BlockSpec((1, tn_e), lambda i, j, k: (0, j)),     # scale*(b+ab)
            ],
            out_specs=pl.BlockSpec((tm_e, tn_e), lambda i, j, k: (i, j)),
            scratch_shapes=scratch_shapes,
        ),
        compiler_params=pltpu.CompilerParams(
            dimension_semantics=("parallel", "parallel", "arbitrary"),
            vmem_limit_bytes=vmem_limit,
        ),
        cost_estimate=cost,
    )(x2d, w, svec, sbvec)

    out = out[:M, :N]
    return out.reshape(*lead_shape, N)


if __name__ == "__main__":
    key = jax.random.PRNGKey(0)
    k_x, k_w, k_b, k_ab, k_as = jax.random.split(key, 5)

    batch, seq, in_features, out_features = 2, 8, 32, 64

    x = jax.random.normal(k_x, (batch, seq, in_features), dtype=jnp.float32)

    # torch.nn.Linear-style init shapes; nonzero adapter params to exercise
    # the full adapter formula.
    bound = 1.0 / (in_features ** 0.5)
    weight = jax.random.uniform(
        k_w, (out_features, in_features), dtype=jnp.float32,
        minval=-bound, maxval=bound)
    bias = jax.random.uniform(
        k_b, (out_features,), dtype=jnp.float32, minval=-bound, maxval=bound)
    adapter_bias = 0.1 * jax.random.normal(
        k_ab, (out_features,), dtype=jnp.float32)
    adapter_scale = 1.0 + 0.1 * jax.random.normal(
        k_as, (out_features,), dtype=jnp.float32)

    y = adapter_v2_linear(x, weight, bias, adapter_bias, adapter_scale)
    y = jax.block_until_ready(y)

    # Pure-JAX reference check.
    y_ref = adapter_scale * (x @ weight.T + bias + adapter_bias)
    assert y.shape == (batch, seq, out_features)
    assert jnp.allclose(y, y_ref, atol=1e-5, rtol=1e-4), float(
        jnp.max(jnp.abs(y - y_ref)))

    # Exercise the multi-K (accumulator) path too, at a larger aligned shape.
    k2 = jax.random.PRNGKey(1)
    k_x2, k_w2, k_b2 = jax.random.split(k2, 3)
    M2, K2, N2 = 256, 1024, 256
    x2 = jax.random.normal(k_x2, (M2, K2), dtype=jnp.float32)
    w2 = jax.random.normal(k_w2, (N2, K2), dtype=jnp.float32) * 0.02
    b2 = jax.random.normal(k_b2, (N2,), dtype=jnp.float32) * 0.02
    ab2 = jnp.full((N2,), 0.05, dtype=jnp.float32)
    as2 = jnp.full((N2,), 1.25, dtype=jnp.float32)
    y2 = jax.block_until_ready(
        adapter_v2_linear(x2, w2, b2, ab2, as2, tm=128, tn=128, tk=256))
    y2_ref = as2 * (x2 @ w2.T + b2 + ab2)
    assert jnp.allclose(y2, y2_ref, atol=1e-3, rtol=1e-3), float(
        jnp.max(jnp.abs(y2 - y2_ref)))

    print("KERNEL_OK")
</pallas_src>

<mosaic_0001>
module attributes {stable_mosaic.version = 11 : i64} {
  func.func @adapter_linear_kernel_single_k(%arg0: i32, %arg1: i32, %arg2: i32, %arg3: memref<16x128xf32, #tpu.memory_space<vmem>>, %arg4: memref<128x128xf32, #tpu.memory_space<vmem>>, %arg5: memref<1x128xf32, #tpu.memory_space<vmem>>, %arg6: memref<1x128xf32, #tpu.memory_space<vmem>>, %arg7: memref<16x128xf32, #tpu.memory_space<vmem>>) attributes {dimension_semantics = [#tpu.dimension_semantics<parallel>, #tpu.dimension_semantics<parallel>, #tpu.dimension_semantics<arbitrary>], iteration_bounds = array<i64: 1, 1, 1>, scalar_prefetch = 0 : i64, scratch_operands = 0 : i64, tpu.core_type = #tpu.core_type<tc>, window_params = [{transform_indices = @transform_0, window_bounds = array<i64: 16, 128>}, {transform_indices = @transform_1, window_bounds = array<i64: 128, 128>}, {transform_indices = @transform_2, window_bounds = array<i64: 1, 128>}, {transform_indices = @transform_3, window_bounds = array<i64: 1, 128>}, {transform_indices = @transform_4, window_bounds = array<i64: 16, 128>}]} {
    %c0 = arith.constant 0 : index
    %c0_0 = arith.constant 0 : index
    %0 = vector.load %arg3[%c0, %c0_0] : memref<16x128xf32, #tpu.memory_space<vmem>>, vector<16x128xf32>
    %c0_1 = arith.constant 0 : index
    %c0_2 = arith.constant 0 : index
    %1 = vector.load %arg4[%c0_1, %c0_2] : memref<128x128xf32, #tpu.memory_space<vmem>>, vector<128x128xf32>
    %cst = arith.constant dense<0.000000e+00> : vector<16x128xf32>
    %2 = tpu.matmul %0, %1, %cst {dimension_numbers = #tpu.dot_dimension_numbers<[1], [1], [0], [0], [0, 0, 1, 0], [], []>} : vector<16x128xf32>, vector<128x128xf32>, vector<16x128xf32> -> vector<16x128xf32>
    %c0_3 = arith.constant 0 : index
    %c0_4 = arith.constant 0 : index
    %3 = vector.load %arg5[%c0_3, %c0_4] : memref<1x128xf32, #tpu.memory_space<vmem>>, vector<1x128xf32>
    %4 = vector.broadcast %3 : vector<1x128xf32> to vector<16x128xf32>
    %5 = arith.mulf %2, %4 : vector<16x128xf32>
    %c0_5 = arith.constant 0 : index
    %c0_6 = arith.constant 0 : index
    %6 = vector.load %arg6[%c0_5, %c0_6] : memref<1x128xf32, #tpu.memory_space<vmem>>, vector<1x128xf32>
    %7 = vector.broadcast %6 : vector<1x128xf32> to vector<16x128xf32>
    %8 = arith.addf %5, %7 : vector<16x128xf32>
    %c0_7 = arith.constant 0 : index
    %c0_8 = arith.constant 0 : index
    %9 = vector.load %arg7[%c0_7, %c0_8] : memref<16x128xf32, #tpu.memory_space<vmem>>, vector<16x128xf32>
    tpu.vector_store %arg7[%c0_7, %c0_8], %8 {strides = array<i32>} : memref<16x128xf32, #tpu.memory_space<vmem>>, vector<16x128xf32>,
    return
  }
  func.func @transform_0(%arg0: i32, %arg1: i32, %arg2: i32) -> (i32, i32) {
    %c0_i32 = arith.constant 0 : i32
    return %arg0, %arg2 : i32, i32
  }
  func.func @transform_1(%arg0: i32, %arg1: i32, %arg2: i32) -> (i32, i32) {
    %c0_i32 = arith.constant 0 : i32
    return %arg1, %arg2 : i32, i32
  }
  func.func @transform_2(%arg0: i32, %arg1: i32, %arg2: i32) -> (i32, i32) {
    %c0_i32 = arith.constant 0 : i32
    %c0_i32_0 = arith.constant 0 : i32
    return %c0_i32, %arg1 : i32, i32
  }
  func.func @transform_3(%arg0: i32, %arg1: i32, %arg2: i32) -> (i32, i32) {
    %c0_i32 = arith.constant 0 : i32
    %c0_i32_0 = arith.constant 0 : i32
    return %c0_i32, %arg1 : i32, i32
  }
  func.func @transform_4(%arg0: i32, %arg1: i32, %arg2: i32) -> (i32, i32) {
    %c0_i32 = arith.constant 0 : i32
    return %arg0, %arg1 : i32, i32
  }
}

</mosaic_0001>

<llo_original>
// kernel: adapter_v2_linear.1
$region0: #{adapter_v2_linear.1}
  #allocation0 [shape = 'u32[]', space=smem, size = 0x4, offset = 0x4, fixed_abs, tag = 'smem constant byte address 0x4 - core index']
  #allocation1 [shape = 'u32[144,128]{1,0:T(1,128)}', space=vmem, size = 0x12000, scoped, tag = 'internal scratch']
  %s0 = inlined_call_operand.vmem [shape: f32[16,128], index: 0, kind: input, shape index: {}]
  %s1 = inlined_call_operand.vmem [shape: f32[128,128], index: 1, kind: input, shape index: {}]
  %s2 = inlined_call_operand.vmem [shape: f32[1,128], index: 2, kind: input, shape index: {}]
  %s3 = inlined_call_operand.vmem [shape: f32[1,128], index: 3, kind: input, shape index: {}]
  %s4 = inlined_call_operand.vmem [shape: f32[16,128], index: 4, kind: output, shape index: {}]
  %s5 = sld [smem:[#allocation0]]
  $region26: #{adapter_v2_linear.1} parent=0
    _
  %s7 = ssub.s32 1, %s5
  %s8 = scalar_select 0, %s7, %s5
  // Predicated region
  $region2: #{adapter_v2_linear.1} parent=0 // pred_check
    _
  $region3: #{adapter_v2_linear.1} parent=0 // pred_check_branch
    %10 = sbr.rel (0) target = $region5
  $region4: #{adapter_v2_linear.1} parent=0 // pred_region
    _
  $region5: #{adapter_v2_linear.1} parent=0 // pred_fallthru
    _
  // Predicated region
  $region6: #{adapter_v2_linear.1} parent=0 // pred_check
    _
  $region7: #{adapter_v2_linear.1} parent=0 // pred_check_branch
    %12 = sbr.rel (0) target = $region9
  $region8: #{adapter_v2_linear.1} parent=0 // pred_region
    _
  $region9: #{adapter_v2_linear.1} parent=0 // pred_fallthru
    _
  // Predicated region
  $region10: #{adapter_v2_linear.1} parent=0 // pred_check
    _
  $region11: #{adapter_v2_linear.1} parent=0 // pred_check_branch
    %14 = sbr.rel (0) target = $region13
  $region12: #{adapter_v2_linear.1} parent=0 // pred_region
    _
  $region13: #{adapter_v2_linear.1} parent=0 // pred_fallthru
    _
  // Predicated region
  $region14: #{adapter_v2_linear.1} parent=0 // pred_check
    _
  $region15: #{adapter_v2_linear.1} parent=0 // pred_check_branch
    %16 = sbr.rel (0) target = $region17
  $region16: #{adapter_v2_linear.1} parent=0 // pred_region
    _
  $region17: #{adapter_v2_linear.1} parent=0 // pred_fallthru
    _
  %v17 = vld [vmem:[%s0] sm:$0xff]
  %v18 = vld [vmem:[%s0 + $0x8] sm:$0xff]
  %v19 = vld [vmem:[%s1] sm:$0xff]
  %v20 = vld [vmem:[%s1 + $0x8] sm:$0xff]
  %v21 = vld [vmem:[%s1 + $0x10] sm:$0xff]
  %v22 = vld [vmem:[%s1 + $0x18] sm:$0xff]
  %v23 = vld [vmem:[%s1 + $0x20] sm:$0xff]
  %v24 = vld [vmem:[%s1 + $0x28] sm:$0xff]
  %v25 = vld [vmem:[%s1 + $0x30] sm:$0xff]
  %v26 = vld [vmem:[%s1 + $0x38] sm:$0xff]
  %v27 = vld [vmem:[%s1 + $0x40] sm:$0xff]
  %v28 = vld [vmem:[%s1 + $0x48] sm:$0xff]
  %v29 = vld [vmem:[%s1 + $0x50] sm:$0xff]
  %v30 = vld [vmem:[%s1 + $0x58] sm:$0xff]
  %v31 = vld [vmem:[%s1 + $0x60] sm:$0xff]
  %v32 = vld [vmem:[%s1 + $0x68] sm:$0xff]
  %v33 = vld [vmem:[%s1 + $0x70] sm:$0xff]
  %v34 = vld [vmem:[%s1 + $0x78] sm:$0xff]
  %35 = vmatprep.subr.mxu0 0.0
  %36 = vmatpush1.xpose.msra.mxu0 %v19
  %37 = vmatprep.subr.mxu0 0.0
  %38 = vmatpush1.xpose.msra.mxu0 %v20
  %39 = vmatprep.subr.mxu0 0.0
  %40 = vmatpush1.xpose.msra.mxu0 %v21
  %41 = vmatprep.subr.mxu0 0.0
  %42 = vmatpush1.xpose.msra.mxu0 %v22
  %43 = vmatprep.subr.mxu0 0.0
  %44 = vmatpush1.xpose.msra.mxu0 %v23
  %45 = vmatprep.subr.mxu0 0.0
  %46 = vmatpush1.xpose.msra.mxu0 %v24
  %47 = vmatprep.subr.mxu0 0.0
  %48 = vmatpush1.xpose.msra.mxu0 %v25
  %49 = vmatprep.subr.mxu0 0.0
  %50 = vmatpush1.xpose.msra.mxu0 %v26
  %51 = vmatprep.subr.mxu0 0.0
  %52 = vmatpush1.xpose.msra.mxu0 %v27
  %53 = vmatprep.subr.mxu0 0.0
  %54 = vmatpush1.xpose.msra.mxu0 %v28
  %55 = vmatprep.subr.mxu0 0.0
  %56 = vmatpush1.xpose.msra.mxu0 %v29
  %57 = vmatprep.subr.mxu0 0.0
  %58 = vmatpush1.xpose.msra.mxu0 %v30
  %59 = vmatprep.subr.mxu0 0.0
  %60 = vmatpush1.xpose.msra.mxu0 %v31
  %61 = vmatprep.subr.mxu0 0.0
  %62 = vmatpush1.xpose.msra.mxu0 %v32
  %63 = vmatprep.subr.mxu0 0.0
  %64 = vmatpush1.xpose.msra.mxu0 %v33
  %65 = vmatprep.subr.mxu0 0.0
  %66 = vmatpush1.xpose.msra.mxu0 %v34
  %67 = vmatprep.subr.mxu0 0.0
  %68 = vmatpush1.xpose.msra.mxu0 0.0
  %69 = vmatprep.subr.mxu0 0.0
  %70 = vmatpush1.xpose.msra.mxu0 0.0
  %71 = vmatprep.subr.mxu0 0.0
  %72 = vmatpush1.xpose.msra.mxu0 0.0
  %73 = vmatprep.subr.mxu0 0.0
  %74 = vmatpush1.xpose.msra.mxu0 0.0
  %75 = vmatprep.subr.mxu0 0.0
  %76 = vmatpush1.xpose.msra.mxu0 0.0
  %77 = vmatprep.subr.mxu0 0.0
  %78 = vmatpush1.xpose.msra.mxu0 0.0
  %79 = vmatprep.subr.mxu0 0.0
  %80 = vmatpush1.xpose.msra.mxu0 0.0
  %81 = vmatprep.subr.mxu0 0.0
  %82 = vmatpush1.xpose.msra.mxu0 0.0
  %83 = vmatprep.subr.mxu0 0.0
  %84 = vmatpush1.xpose.msra.mxu0 0.0
  %85 = vmatprep.subr.mxu0 0.0
  %86 = vmatpush1.xpose.msra.mxu0 0.0
  %87 = vmatprep.subr.mxu0 0.0
  %88 = vmatpush1.xpose.msra.mxu0 0.0
  %89 = vmatprep.subr.mxu0 0.0
  %90 = vmatpush1.xpose.msra.mxu0 0.0
  %91 = vmatprep.subr.mxu0 0.0
  %92 = vmatpush1.xpose.msra.mxu0 0.0
  %93 = vmatprep.subr.mxu0 0.0
  %94 = vmatpush1.xpose.msra.mxu0 0.0
  %95 = vmatprep.subr.mxu0 0.0
  %96 = vmatpush1.xpose.msra.mxu0 0.0
  %97 = vmatprep.subr.mxu0 0.0
  %98 = vmatpush1.xpose.msra.mxu0 0.0
  %99 = vmatprep.mubr.f32.mxu0 0.0
  %100 = vmatmul.mubr.f32.gmra.mrb[0].mxu0 %v17
  %v101 = vpop.f32.mrb[0].mxu0
  %v102 = vadd.f32 0.0, %v101
  %v103 = vpop.f32.mrb[0].mxu0
  %104 = vmatprep.mubr.f32.mxu0 0.0
  %105 = vmatmul.mubr.f32.gmra.mrb[0].mxu0 %v18
  %v106 = vpop.f32.mrb[0].mxu0
  %v107 = vadd.f32 0.0, %v106
  %v108 = vpop.f32.mrb[0].mxu0
  %109 = vdwg.mxu0
  %v110 = vld [vmem:[%s2] sm:$0x1]
  %v112 = vlaneseq
  %v113 = vshrl.u32 %v112, 7
  %v114 = vsub.s32 0, %v113
  %v115 = vrot.slane %v110, %v114
  %v117 = vmul.f32 %v102, %v115
  %v118 = vmul.f32 %v107, %v115
  %v119 = vld [vmem:[%s3] sm:$0x1]
  %v121 = vlaneseq
  %v122 = vshrl.u32 %v121, 7
  %v123 = vsub.s32 0, %v122
  %v124 = vrot.slane %v119, %v123
  %v126 = vadd.f32 %v117, %v124
  %v127 = vadd.f32 %v118, %v124
  %128 = vst [vmem:[%s4] sm:$0xff] %v126
  %129 = vst [vmem:[%s4 + $0x8] sm:$0xff] %v127
  // Predicated region
  $region18: #{adapter_v2_linear.1} parent=0 // pred_check
    _
  $region19: #{adapter_v2_linear.1} parent=0 // pred_check_branch
    %131 = sbr.rel (0) target = $region21
  $region20: #{adapter_v2_linear.1} parent=0 // pred_region
    _
  $region21: #{adapter_v2_linear.1} parent=0 // pred_fallthru
    _
  // Predicated region
  $region22: #{adapter_v2_linear.1} parent=0 // pred_check
    _
  $region23: #{adapter_v2_linear.1} parent=0 // pred_check_branch
    %133 = sbr.rel (0) target = $region25
  $region24: #{adapter_v2_linear.1} parent=0 // pred_region
    _
  $region25: #{adapter_v2_linear.1} parent=0 // pred_fallthru
    _

</llo_original>
